<compile_context>
chip_gen: v7x
topology: tpu7x:2x2x1
jax: 0.10.0
libtpu: 0.0.40
codegen_flags: <defaults>
</compile_context>

<pallas_src>
import jax
import jax.numpy as jnp
import numpy as np
from jax import lax
from jax.experimental import pallas as pl
from jax.experimental.pallas import tpu as pltpu


def _fcnn_kernel(x_ref, w1_ref, b1_ref, w2_ref, b2_ref, o_ref):
    """Fused FCNN forward for one row-block, computed transposed.

      x_ref  : (tm, D)  input rows for this block
      w1_ref : (H, D)   fc1 weight, native nn.Linear (out, in) layout
      b1_ref : (H, 1)   fc1 bias as a column
      w2_ref : (1, H)   fc2 weight, native layout
      b2_ref : (1, 1)   fc2 bias
      o_ref  : (1, tm)  sigmoid outputs, lane-dense (one lane per batch row)
    """
    x = x_ref[...]

    # fc1 + bias + ReLU, computed as W1 @ x^T -> (H, tm): batch rows land on
    # lanes (MXU matmul, f32 accumulation), bias is a lane-broadcast column.
    h = lax.dot_general(
        w1_ref[...], x,
        dimension_numbers=(((1,), (1,)), ((), ())),
        preferred_element_type=jnp.float32)
    h = jnp.maximum(h + b1_ref[...], 0.0)

    # TODO(synk): training-mode dropout (pltpu.prng_seed + pltpu.prng_random_bits
    # mask, scaled by 1/(1-p)) not implemented; eval-mode dropout is identity.

    # fc2 + bias + sigmoid: (1, H) @ (H, tm) -> (1, tm), already lane-dense.
    y = jnp.dot(w2_ref[...], h, preferred_element_type=jnp.float32) + b2_ref[...]
    o_ref[...] = jax.nn.sigmoid(y).astype(o_ref.dtype)


def _round_up(n, m):
    return ((n + m - 1) // m) * m


def _pick_row_tile(n, block_rows):
    """Row tile: multiple of 8, <= block_rows, and split so the grid has >= 2
    steps when the batch is large enough (keeps both v7x TensorCores busy)."""
    block_rows = max(8, _round_up(block_rows, 8))
    tm = min(block_rows, _round_up(n, 8))
    if n <= block_rows and n >= 16:
        tm = min(tm, _round_up((n + 1) // 2, 8))
    return max(tm, 8)


def fcnn_forward(x, w1, b1, w2, b2, *, block_rows=512):
    """x: (N, D) f32.  w1: (H, D), b1: (H,), w2: (1, H), b2: (1,)  ->  (N, 1)."""
    N, D = x.shape
    H = w1.shape[0]

    tm = _pick_row_tile(N, block_rows)
    nb = pl.cdiv(N, tm)

    b1_col = b1.reshape(H, 1)
    b2_2d = b2.reshape(1, 1)
    # TODO(synk): b1/b2 could live in SMEM (pl.BlockSpec(memory_space=
    # pltpu.MemorySpace.SMEM)) to save a VMEM tile + DMA descriptor each.

    out = pl.pallas_call(
        _fcnn_kernel,
        out_shape=jax.ShapeDtypeStruct((nb, 1, tm), x.dtype),
        grid_spec=pltpu.PrefetchScalarGridSpec(
            num_scalar_prefetch=0,
            grid=(nb,),
            in_specs=[
                pl.BlockSpec((tm, D), lambda i: (i, 0)),   # x rows (ragged last block OK)
                pl.BlockSpec((H, D), lambda i: (0, 0)),    # w1, resident across grid
                pl.BlockSpec((H, 1), lambda i: (0, 0)),    # b1
                pl.BlockSpec((1, H), lambda i: (0, 0)),    # w2
                pl.BlockSpec((1, 1), lambda i: (0, 0)),    # b2
            ],
            out_specs=pl.BlockSpec((None, 1, tm), lambda i: (i, 0, 0)),
        ),
        compiler_params=pltpu.CompilerParams(
            dimension_semantics=("parallel",)),
    )(x, w1, b1_col, w2, b2_2d)

    # (nb, 1, tm) lane-dense rows -> flatten, drop rows past N, back to (N, 1).
    return out.reshape(nb * tm)[:N].reshape(N, 1)


def init_fcnn_params(key, input_sizes, hidden=64, out_dim=1):
    """nn.Linear-style init; weights kept in native (out, in) layout."""
    k1 = 1.0 / float(np.sqrt(input_sizes))
    k2 = 1.0 / float(np.sqrt(hidden))
    ka, kb, kc, kd = jax.random.split(key, 4)
    w1 = jax.random.uniform(ka, (hidden, input_sizes), jnp.float32, -k1, k1)
    b1 = jax.random.uniform(kb, (hidden,), jnp.float32, -k1, k1)
    w2 = jax.random.uniform(kc, (out_dim, hidden), jnp.float32, -k2, k2)
    b2 = jax.random.uniform(kd, (out_dim,), jnp.float32, -k2, k2)
    return w1, b1, w2, b2


# ---- pure-JAX reference (eval-mode dropout = identity) ----
def fcnn_ref(x, w1, b1, w2, b2):
    h = jnp.maximum(x @ w1.T + b1, 0.0)
    return jax.nn.sigmoid(h @ w2.T + b2)


if __name__ == "__main__":
    # Small shapes consistent with the module: batch=8, input_sizes=16,
    # hidden=64 (fixed by fc1), output=1 (fixed by fc2).
    N, D_IN, HIDDEN, OUT = 8, 16, 64, 1

    key = jax.random.PRNGKey(0)
    key, kx = jax.random.split(key)
    x = jax.random.normal(kx, (N, D_IN), jnp.float32)
    w1, b1, w2, b2 = init_fcnn_params(key, D_IN, HIDDEN, OUT)

    out = jax.block_until_ready(fcnn_forward(x, w1, b1, w2, b2))
    assert out.shape == (N, OUT), out.shape
    ref = jax.block_until_ready(fcnn_ref(x, w1, b1, w2, b2))
    np.testing.assert_allclose(np.asarray(out), np.asarray(ref),
                               atol=1e-5, rtol=1e-5)

    # Also exercise the multi-block + ragged-final-block path (no host padding).
    N2 = 40
    x2 = jax.random.normal(jax.random.PRNGKey(1), (N2, D_IN), jnp.float32)
    out2 = jax.block_until_ready(fcnn_forward(x2, w1, b1, w2, b2, block_rows=24))
    ref2 = jax.block_until_ready(fcnn_ref(x2, w1, b1, w2, b2))
    np.testing.assert_allclose(np.asarray(out2), np.asarray(ref2),
                               atol=1e-5, rtol=1e-5)

    print("KERNEL_OK")
</pallas_src>

<mosaic_0001>
module attributes {stable_mosaic.version = 11 : i64} {
  func.func @_fcnn_kernel(%arg0: i32, %arg1: memref<8x16xf32, #tpu.memory_space<vmem>>, %arg2: memref<64x16xf32, #tpu.memory_space<vmem>>, %arg3: memref<64x1xf32, #tpu.memory_space<vmem>>, %arg4: memref<1x64xf32, #tpu.memory_space<vmem>>, %arg5: memref<1x1xf32, #tpu.memory_space<vmem>>, %arg6: memref<1x1x8xf32, #tpu.memory_space<vmem>>) attributes {dimension_semantics = [#tpu.dimension_semantics<parallel>], iteration_bounds = array<i64: 1>, scalar_prefetch = 0 : i64, scratch_operands = 0 : i64, tpu.core_type = #tpu.core_type<tc>, window_params = [{transform_indices = @transform_0, window_bounds = array<i64: 8, 16>}, {pipeline_mode = #tpu.pipeline_mode<synchronous>, transform_indices = @transform_1, window_bounds = array<i64: 64, 16>}, {pipeline_mode = #tpu.pipeline_mode<synchronous>, transform_indices = @transform_2, window_bounds = array<i64: 64, 1>}, {pipeline_mode = #tpu.pipeline_mode<synchronous>, transform_indices = @transform_3, window_bounds = array<i64: 1, 64>}, {pipeline_mode = #tpu.pipeline_mode<synchronous>, transform_indices = @transform_4, window_bounds = array<i64: 1, 1>}, {transform_indices = @transform_5, window_bounds = array<i64: 1, 1, 8>}]} {
    %c0 = arith.constant 0 : index
    %c0_0 = arith.constant 0 : index
    %0 = vector.load %arg1[%c0, %c0_0] : memref<8x16xf32, #tpu.memory_space<vmem>>, vector<8x16xf32>
    %c0_1 = arith.constant 0 : index
    %c0_2 = arith.constant 0 : index
    %1 = vector.load %arg2[%c0_1, %c0_2] : memref<64x16xf32, #tpu.memory_space<vmem>>, vector<64x16xf32>
    %cst = arith.constant dense<0.000000e+00> : vector<64x8xf32>
    %2 = tpu.matmul %1, %0, %cst {dimension_numbers = #tpu.dot_dimension_numbers<[1], [1], [0], [0], [0, 0, 1, 0], [], []>} : vector<64x16xf32>, vector<8x16xf32>, vector<64x8xf32> -> vector<64x8xf32>
    %c0_3 = arith.constant 0 : index
    %c0_4 = arith.constant 0 : index
    %3 = vector.load %arg3[%c0_3, %c0_4] : memref<64x1xf32, #tpu.memory_space<vmem>>, vector<64x1xf32>
    %4 = vector.broadcast %3 : vector<64x1xf32> to vector<64x8xf32>
    %5 = arith.addf %2, %4 : vector<64x8xf32>
    %cst_5 = arith.constant 0.000000e+00 : f32
    %6 = vector.broadcast %cst_5 : f32 to vector<64x8xf32>
    %7 = arith.maximumf %5, %6 : vector<64x8xf32>
    %c0_6 = arith.constant 0 : index
    %c0_7 = arith.constant 0 : index
    %8 = vector.load %arg4[%c0_6, %c0_7] : memref<1x64xf32, #tpu.memory_space<vmem>>, vector<1x64xf32>
    %cst_8 = arith.constant dense<0.000000e+00> : vector<1x8xf32>
    %9 = tpu.matmul %8, %7, %cst_8 {dimension_numbers = #tpu.dot_dimension_numbers<[1], [0], [0], [1], [0, 0, 1, 1], [], []>} : vector<1x64xf32>, vector<64x8xf32>, vector<1x8xf32> -> vector<1x8xf32>
    %c0_9 = arith.constant 0 : index
    %c0_10 = arith.constant 0 : index
    %10 = vector.load %arg5[%c0_9, %c0_10] : memref<1x1xf32, #tpu.memory_space<vmem>>, vector<1x1xf32>
    %11 = vector.broadcast %10 : vector<1x1xf32> to vector<1x8xf32>
    %12 = arith.addf %9, %11 : vector<1x8xf32>
    %13 = arith.negf %12 : vector<1x8xf32>
    %14 = math.exp %13 : vector<1x8xf32>
    %cst_11 = arith.constant 1.000000e+00 : f32
    %15 = vector.broadcast %cst_11 : f32 to vector<1x8xf32>
    %16 = arith.addf %15, %14 : vector<1x8xf32>
    %17 = arith.divf %15, %16 : vector<1x8xf32>
    %c0_12 = arith.constant 0 : index
    %c0_13 = arith.constant 0 : index
    %c0_14 = arith.constant 0 : index
    %18 = vector.load %arg6[%c0_12, %c0_13, %c0_14] : memref<1x1x8xf32, #tpu.memory_space<vmem>>, vector<1x1x8xf32>
    %19 = vector.shape_cast %18 : vector<1x1x8xf32> to vector<1x8xf32>
    %20 = vector.shape_cast %17 : vector<1x8xf32> to vector<1x1x8xf32>
    tpu.vector_store %arg6[%c0_12, %c0_13, %c0_14], %20 {strides = array<i32>} : memref<1x1x8xf32, #tpu.memory_space<vmem>>, vector<1x1x8xf32>,
    return
  }
  func.func @transform_0(%arg0: i32) -> (i32, i32) {
    %c0_i32 = arith.constant 0 : i32
    %c0_i32_0 = arith.constant 0 : i32
    return %arg0, %c0_i32 : i32, i32
  }
  func.func @transform_1(%arg0: i32) -> (i32, i32) {
    %c0_i32 = arith.constant 0 : i32
    %c0_i32_0 = arith.constant 0 : i32
    %c0_i32_1 = arith.constant 0 : i32
    return %c0_i32, %c0_i32_0 : i32, i32
  }
  func.func @transform_2(%arg0: i32) -> (i32, i32) {
    %c0_i32 = arith.constant 0 : i32
    %c0_i32_0 = arith.constant 0 : i32
    %c0_i32_1 = arith.constant 0 : i32
    return %c0_i32, %c0_i32_0 : i32, i32
  }
  func.func @transform_3(%arg0: i32) -> (i32, i32) {
    %c0_i32 = arith.constant 0 : i32
    %c0_i32_0 = arith.constant 0 : i32
    %c0_i32_1 = arith.constant 0 : i32
    return %c0_i32, %c0_i32_0 : i32, i32
  }
  func.func @transform_4(%arg0: i32) -> (i32, i32) {
    %c0_i32 = arith.constant 0 : i32
    %c0_i32_0 = arith.constant 0 : i32
    %c0_i32_1 = arith.constant 0 : i32
    return %c0_i32, %c0_i32_0 : i32, i32
  }
  func.func @transform_5(%arg0: i32) -> (i32, i32, i32) {
    %c0_i32 = arith.constant 0 : i32
    %c0_i32_0 = arith.constant 0 : i32
    %c0_i32_1 = arith.constant 0 : i32
    return %arg0, %c0_i32, %c0_i32_0 : i32, i32, i32
  }
}

</mosaic_0001>

<llo_original>
// kernel: tpu_custom_call.1
$region0: #{tpu_custom_call.1}
  #allocation0 [shape = 'u32[]', space=smem, size = 0x4, offset = 0x4, fixed_abs, tag = 'smem constant byte address 0x4 - core index']
  #allocation1 [shape = 'u32[144,128]{1,0:T(1,128)}', space=vmem, size = 0x12000, scoped, tag = 'internal scratch']
  #allocation2 [shape = 'f32[1,1]{1,0:T(1,128)S(1)}', space=vmem, size = 0x200, scoped, tag = 'scoped memory for tpu_custom_call.1']
  %s0 = inlined_call_operand.vmem [shape: f32[8,16], index: 0, kind: input, shape index: {}]
  %s1 = inlined_call_operand.vmem [shape: f32[64,16], index: 1, kind: input, shape index: {}]
  %s2 = inlined_call_operand.vmem [shape: f32[64,1], index: 2, kind: input, shape index: {}]
  %s3 = inlined_call_operand.vmem [shape: f32[1,64], index: 3, kind: input, shape index: {}]
  %s4 = inlined_call_operand.<no memory space> [shape: f32[1,1], index: 4, kind: input, shape index: {}]
  %s5 = inlined_call_operand.hbm [shape: f32[1,1,8], index: 5, kind: output, shape index: {}]
  %s6 = sld [smem:[#allocation0]]
  $region30: #{tpu_custom_call.1} parent=0
    _
  %s8 = ssub.s32 1, %s6
  %s9 = scalar_select 0, %s8, %s6
  %v10 = vstv %s4
  %11 = vst [vmem:[#allocation2] sm:$0x1] %v10
  $region1: #{tpu_custom_call.1} parent=0
    #allocation3 [shape = 'u8[512]{0}', space=vmem, size = 0x400, scoped, tag = 'output window, operand 0, single buffered']
    #allocation4 [shape = 's32[1]{0}', space=sflag, size = 0x4, scoped, tag = 'scoped memory for tpu_custom_call.1']
    %12 = vsyncpa [#allocation4], 0
    // Predicated region
    $region2: #{tpu_custom_call.1} parent=1 // pred_check
      _
    $region3: #{tpu_custom_call.1} parent=1 // pred_check_branch
      %14 = sbr.rel (0) target = $region5
    $region4: #{tpu_custom_call.1} parent=1 // pred_region
      _
    $region5: #{tpu_custom_call.1} parent=1 // pred_fallthru
      _
    // Predicated region
    $region6: #{tpu_custom_call.1} parent=1 // pred_check
      _
    $region7: #{tpu_custom_call.1} parent=1 // pred_check_branch
      %16 = sbr.rel (0) target = $region9
    $region8: #{tpu_custom_call.1} parent=1 // pred_region
      _
    $region9: #{tpu_custom_call.1} parent=1 // pred_fallthru
      _
    // Predicated region
    $region10: #{tpu_custom_call.1} parent=1 // pred_check
      _
    $region11: #{tpu_custom_call.1} parent=1 // pred_check_branch
      %18 = sbr.rel (0) target = $region13
    $region12: #{tpu_custom_call.1} parent=1 // pred_region
      _
    $region13: #{tpu_custom_call.1} parent=1 // pred_fallthru
      _
    // Predicated region
    $region14: #{tpu_custom_call.1} parent=1 // pred_check
      _
    $region15: #{tpu_custom_call.1} parent=1 // pred_check_branch
      %20 = sbr.rel (0) target = $region17
    $region16: #{tpu_custom_call.1} parent=1 // pred_region
      _
    $region17: #{tpu_custom_call.1} parent=1 // pred_fallthru
      _
    // Predicated region
    $region18: #{tpu_custom_call.1} parent=1 // pred_check
      _
    $region19: #{tpu_custom_call.1} parent=1 // pred_check_branch
      %22 = sbr.rel (0) target = $region21
    $region20: #{tpu_custom_call.1} parent=1 // pred_region
      _
    $region21: #{tpu_custom_call.1} parent=1 // pred_fallthru
      _
    %v23 = vld [vmem:[%s0] sm:$0xff]
    %v24 = vld [vmem:[%s1] sm:$0xff]
    %v25 = vld [vmem:[%s1 + $0x8] sm:$0xff]
    %v26 = vld [vmem:[%s1 + $0x10] sm:$0xff]
    %v27 = vld [vmem:[%s1 + $0x18] sm:$0xff]
    %v28 = vld [vmem:[%s1 + $0x20] sm:$0xff]
    %v29 = vld [vmem:[%s1 + $0x28] sm:$0xff]
    %v30 = vld [vmem:[%s1 + $0x30] sm:$0xff]
    %v31 = vld [vmem:[%s1 + $0x38] sm:$0xff]
    %v32 = vld [vmem:[%s2] sm:$0xff]
    %v33 = vld [vmem:[%s2 + $0x8] sm:$0xff]
    %v34 = vld [vmem:[%s2 + $0x10] sm:$0xff]
    %v35 = vld [vmem:[%s2 + $0x18] sm:$0xff]
    %v36 = vld [vmem:[%s2 + $0x20] sm:$0xff]
    %v37 = vld [vmem:[%s2 + $0x28] sm:$0xff]
    %v38 = vld [vmem:[%s2 + $0x30] sm:$0xff]
    %v39 = vld [vmem:[%s2 + $0x38] sm:$0xff]
    %41 = vset.pattern.permute.xlu0 0
    %42 = vperm.xlu0 %41, %v32
    %v43 = vpop.permute.xlu0 %42
    %46 = vset.pattern.permute.xlu0 0
    %47 = vperm.xlu0 %46, %v33
    %v48 = vpop.permute.xlu0 %47
    %51 = vset.pattern.permute.xlu0 0
    %52 = vperm.xlu0 %51, %v34
    %v53 = vpop.permute.xlu0 %52
    %56 = vset.pattern.permute.xlu0 0
    %57 = vperm.xlu0 %56, %v35
    %v58 = vpop.permute.xlu0 %57
    %61 = vset.pattern.permute.xlu0 0
    %62 = vperm.xlu0 %61, %v36
    %v63 = vpop.permute.xlu0 %62
    %66 = vset.pattern.permute.xlu0 0
    %67 = vperm.xlu0 %66, %v37
    %v68 = vpop.permute.xlu0 %67
    %71 = vset.pattern.permute.xlu0 0
    %72 = vperm.xlu0 %71, %v38
    %v73 = vpop.permute.xlu0 %72
    %76 = vset.pattern.permute.xlu0 0
    %77 = vperm.xlu0 %76, %v39
    %v78 = vpop.permute.xlu0 %77
    %vm80 = vcmask 130048
    %v82 = vsel %vm80, %v24, 0
    %v85 = vsel %vm80, %v25, 0
    %v88 = vsel %vm80, %v26, 0
    %v91 = vsel %vm80, %v27, 0
    %v94 = vsel %vm80, %v28, 0
    %v97 = vsel %vm80, %v29, 0
    %v100 = vsel %vm80, %v30, 0
    %v103 = vsel %vm80, %v31, 0
    %v106 = vsel %vm80, %v23, 0
    %108 = vmatprep.subr.mxu0 0.0
    %109 = vmatpush1.xpose.msra.mxu0 %v106
    %110 = vmatprep.subr.mxu0 0.0
    %111 = vmatpush1.xpose.msra.mxu0 0.0
    %112 = vmatprep.subr.mxu0 0.0
    %113 = vmatpush1.xpose.msra.mxu0 0.0
    %114 = vmatprep.subr.mxu0 0.0
    %115 = vmatpush1.xpose.msra.mxu0 0.0
    %116 = vmatprep.subr.mxu0 0.0
    %117 = vmatpush1.xpose.msra.mxu0 0.0
    %118 = vmatprep.subr.mxu0 0.0
    %119 = vmatpush1.xpose.msra.mxu0 0.0
    %120 = vmatprep.subr.mxu0 0.0
    %121 = vmatpush1.xpose.msra.mxu0 0.0
    %122 = vmatprep.subr.mxu0 0.0
    %123 = vmatpush1.xpose.msra.mxu0 0.0
    %124 = vmatprep.subr.mxu0 0.0
    %125 = vmatpush1.xpose.msra.mxu0 0.0
    %126 = vmatprep.subr.mxu0 0.0
    %127 = vmatpush1.xpose.msra.mxu0 0.0
    %128 = vmatprep.subr.mxu0 0.0
    %129 = vmatpush1.xpose.msra.mxu0 0.0
    %130 = vmatprep.subr.mxu0 0.0
    %131 = vmatpush1.xpose.msra.mxu0 0.0
    %132 = vmatprep.subr.mxu0 0.0
    %133 = vmatpush1.xpose.msra.mxu0 0.0
    %134 = vmatprep.subr.mxu0 0.0
    %135 = vmatpush1.xpose.msra.mxu0 0.0
    %136 = vmatprep.subr.mxu0 0.0
    %137 = vmatpush1.xpose.msra.mxu0 0.0
    %138 = vmatprep.subr.mxu0 0.0
    %139 = vmatpush1.xpose.msra.mxu0 0.0
    %140 = vmatprep.subr.mxu0 0.0
    %141 = vmatpush1.xpose.msra.mxu0 0.0
    %142 = vmatprep.subr.mxu0 0.0
    %143 = vmatpush1.xpose.msra.mxu0 0.0
    %144 = vmatprep.subr.mxu0 0.0
    %145 = vmatpush1.xpose.msra.mxu0 0.0
    %146 = vmatprep.subr.mxu0 0.0
    %147 = vmatpush1.xpose.msra.mxu0 0.0
    %148 = vmatprep.subr.mxu0 0.0
    %149 = vmatpush1.xpose.msra.mxu0 0.0
    %150 = vmatprep.subr.mxu0 0.0
    %151 = vmatpush1.xpose.msra.mxu0 0.0
    %152 = vmatprep.subr.mxu0 0.0
    %153 = vmatpush1.xpose.msra.mxu0 0.0
    %154 = vmatprep.subr.mxu0 0.0
    %155 = vmatpush1.xpose.msra.mxu0 0.0
    %156 = vmatprep.subr.mxu0 0.0
    %157 = vmatpush1.xpose.msra.mxu0 0.0
    %158 = vmatprep.subr.mxu0 0.0
    %159 = vmatpush1.xpose.msra.mxu0 0.0
    %160 = vmatprep.subr.mxu0 0.0
    %161 = vmatpush1.xpose.msra.mxu0 0.0
    %162 = vmatprep.subr.mxu0 0.0
    %163 = vmatpush1.xpose.msra.mxu0 0.0
    %164 = vmatprep.subr.mxu0 0.0
    %165 = vmatpush1.xpose.msra.mxu0 0.0
    %166 = vmatprep.subr.mxu0 0.0
    %167 = vmatpush1.xpose.msra.mxu0 0.0
    %168 = vmatprep.subr.mxu0 0.0
    %169 = vmatpush1.xpose.msra.mxu0 0.0
    %170 = vmatprep.subr.mxu0 0.0
    %171 = vmatpush1.xpose.msra.mxu0 0.0
    %172 = vmatprep.mubr.f32.mxu0 0.0
    %173 = vmatmul.mubr.f32.gmra.mrb[0].mxu0 %v82
    %v174 = vpop.f32.mrb[0].mxu0
    %v175 = vadd.f32 %v43, %v174
    %v176 = vpop.f32.mrb[0].mxu0
    %177 = vmatprep.mubr.f32.mxu0 0.0
    %178 = vmatmul.mubr.f32.gmra.mrb[0].mxu0 %v85
    %v179 = vpop.f32.mrb[0].mxu0
    %v180 = vadd.f32 %v48, %v179
    %v181 = vpop.f32.mrb[0].mxu0
    %182 = vmatprep.mubr.f32.mxu0 0.0
    %183 = vmatmul.mubr.f32.gmra.mrb[0].mxu0 %v88
    %v184 = vpop.f32.mrb[0].mxu0
    %v185 = vadd.f32 %v53, %v184
    %v186 = vpop.f32.mrb[0].mxu0
    %187 = vmatprep.mubr.f32.mxu0 0.0
    %188 = vmatmul.mubr.f32.gmra.mrb[0].mxu0 %v91
    %v189 = vpop.f32.mrb[0].mxu0
    %v190 = vadd.f32 %v58, %v189
    %v191 = vpop.f32.mrb[0].mxu0
    %192 = vmatprep.mubr.f32.mxu0 0.0
    %193 = vmatmul.mubr.f32.gmra.mrb[0].mxu0 %v94
    %v194 = vpop.f32.mrb[0].mxu0
    %v195 = vadd.f32 %v63, %v194
    %v196 = vpop.f32.mrb[0].mxu0
    %197 = vmatprep.mubr.f32.mxu0 0.0
    %198 = vmatmul.mubr.f32.gmra.mrb[0].mxu0 %v97
    %v199 = vpop.f32.mrb[0].mxu0
    %v200 = vadd.f32 %v68, %v199
    %v201 = vpop.f32.mrb[0].mxu0
    %202 = vmatprep.mubr.f32.mxu0 0.0
    %203 = vmatmul.mubr.f32.gmra.mrb[0].mxu0 %v100
    %v204 = vpop.f32.mrb[0].mxu0
    %v205 = vadd.f32 %v73, %v204
    %v206 = vpop.f32.mrb[0].mxu0
    %207 = vmatprep.mubr.f32.mxu0 0.0
    %208 = vmatmul.mubr.f32.gmra.mrb[0].mxu0 %v103
    %v209 = vpop.f32.mrb[0].mxu0
    %v210 = vadd.f32 %v78, %v209
    %v211 = vpop.f32.mrb[0].mxu0
    %212 = vdwg.mxu0
    %v213 = vmax.f32 %v175, 0.0
    %v214 = vmax.f32 %v180, 0.0
    %v215 = vmax.f32 %v185, 0.0
    %v216 = vmax.f32 %v190, 0.0
    %v217 = vmax.f32 %v195, 0.0
    %v218 = vmax.f32 %v200, 0.0
    %v219 = vmax.f32 %v205, 0.0
    %v220 = vmax.f32 %v210, 0.0
    %v221 = vld [vmem:[%s3] sm:$0x1]
    %v222 = vld [vmem:[#allocation2] sm:$0x1]
    %224 = vset.pattern.permute.xlu0 0
    %225 = vperm.xlu0 %224, %v222
    %v226 = vpop.permute.xlu0 %225
    %v228 = vlaneseq
    %v229 = vshrl.u32 %v228, 7
    %v230 = vsub.s32 0, %v229
    %v231 = vrot.slane %v226, %v230
    %vm232 = vcmask 523264
    %v234 = vsel %vm232, %v221, 0
    %236 = vmatprep.subr.mxu0 0.0
    %237 = vmatpush1.msra.mxu0 %v213
    %238 = vmatprep.subr.mxu0 0.0
    %239 = vmatpush1.msra.mxu0 %v214
    %240 = vmatprep.subr.mxu0 0.0
    %241 = vmatpush1.msra.mxu0 %v215
    %242 = vmatprep.subr.mxu0 0.0
    %243 = vmatpush1.msra.mxu0 %v216
    %244 = vmatprep.subr.mxu0 0.0
    %245 = vmatpush1.msra.mxu0 %v217
    %246 = vmatprep.subr.mxu0 0.0
    %247 = vmatpush1.msra.mxu0 %v218
    %248 = vmatprep.subr.mxu0 0.0
    %249 = vmatpush1.msra.mxu0 %v219
    %250 = vmatprep.subr.mxu0 0.0
    %251 = vmatpush1.msra.mxu0 %v220
    %252 = vmatprep.subr.mxu0 0.0
    %253 = vmatpush1.msra.mxu0 0.0
    %254 = vmatprep.subr.mxu0 0.0
    %255 = vmatpush1.msra.mxu0 0.0
    %256 = vmatprep.subr.mxu0 0.0
    %257 = vmatpush1.msra.mxu0 0.0
    %258 = vmatprep.subr.mxu0 0.0
    %259 = vmatpush1.msra.mxu0 0.0
    %260 = vmatprep.subr.mxu0 0.0
    %261 = vmatpush1.msra.mxu0 0.0
    %262 = vmatprep.subr.mxu0 0.0
    %263 = vmatpush1.msra.mxu0 0.0
    %264 = vmatprep.subr.mxu0 0.0
    %265 = vmatpush1.msra.mxu0 0.0
    %266 = vmatprep.subr.mxu0 0.0
    %267 = vmatpush1.msra.mxu0 0.0
    %268 = vmatprep.subr.mxu0 0.0
    %269 = vmatpush1.msra.mxu0 0.0
    %270 = vmatprep.subr.mxu0 0.0
    %271 = vmatpush1.msra.mxu0 0.0
    %272 = vmatprep.subr.mxu0 0.0
    %273 = vmatpush1.msra.mxu0 0.0
    %274 = vmatprep.subr.mxu0 0.0
    %275 = vmatpush1.msra.mxu0 0.0
    %276 = vmatprep.subr.mxu0 0.0
    %277 = vmatpush1.msra.mxu0 0.0
    %278 = vmatprep.subr.mxu0 0.0
    %279 = vmatpush1.msra.mxu0 0.0
    %280 = vmatprep.subr.mxu0 0.0
    %281 = vmatpush1.msra.mxu0 0.0
    %282 = vmatprep.subr.mxu0 0.0
    %283 = vmatpush1.msra.mxu0 0.0
    %284 = vmatprep.subr.mxu0 0.0
    %285 = vmatpush1.msra.mxu0 0.0
    %286 = vmatprep.subr.mxu0 0.0
    %287 = vmatpush1.msra.mxu0 0.0
    %288 = vmatprep.subr.mxu0 0.0
    %289 = vmatpush1.msra.mxu0 0.0
    %290 = vmatprep.subr.mxu0 0.0
    %291 = vmatpush1.msra.mxu0 0.0
    %292 = vmatprep.subr.mxu0 0.0
    %293 = vmatpush1.msra.mxu0 0.0
    %294 = vmatprep.subr.mxu0 0.0
    %295 = vmatpush1.msra.mxu0 0.0
    %296 = vmatprep.subr.mxu0 0.0
    %297 = vmatpush1.msra.mxu0 0.0
    %298 = vmatprep.subr.mxu0 0.0
    %299 = vmatpush1.msra.mxu0 0.0
    %300 = vmatprep.mubr.f32.mxu0 0.0
    %301 = vmatmul.mubr.f32.gmra.mrb[0].mxu0 %v234
    %v302 = vpop.f32.mrb[0].mxu0
    %v303 = vadd.f32 %v231, %v302
    %v304 = vpop.f32.mrb[0].mxu0
    %305 = vdwg.mxu0
    %v306 = vxor.u32 %v303, 2147483648
    %v307 = vmul.f32 %v306, 1.442695
    %v308 = vpow.pop %v307
    %v309 = vadd.f32 %v308, 1.0
    %v310 = vrcp.pop %v309
    %v311 = vmul.f32 1.0, %v310
    %vm312 = vcmask 57344
    %313 = vst.msk [vmem:[#allocation3] sm:$0x1] %vm312, %v311
    // Predicated region
    $region22: #{tpu_custom_call.1} parent=1 // pred_check
      _
    $region23: #{tpu_custom_call.1} parent=1 // pred_check_branch
      %315 = sbr.rel (0) target = $region25
    $region24: #{tpu_custom_call.1} parent=1 // pred_region
      %s317 = ssub.s32 16, 16
      %318 = vsyncadd [#allocation4], %s317
      %s320 = sshll.u32 [#allocation3], 4
      %s321 = int_to_ptr.vmem [resolvable:$true] %s320
      %323 = dma.vmem_to_hbm [thread:$0]  %s321, 16, %s5, [#allocation4]
    $region25: #{tpu_custom_call.1} parent=1 // pred_fallthru
      _
    // Predicated region
    $region26: #{tpu_custom_call.1} parent=1 // pred_check
      _
    $region27: #{tpu_custom_call.1} parent=1 // pred_check_branch
      %325 = sbr.rel (0) target = $region29
    $region28: #{tpu_custom_call.1} parent=1 // pred_region
      %326 = dma.done [#allocation4], 16
    $region29: #{tpu_custom_call.1} parent=1 // pred_fallthru
      _
    %327 = vsyncpa [#allocation4], 1

</llo_original>
